<compile_context>
chip_gen: v7x
topology: tpu7x:2x2x1
jax: 0.10.0
libtpu: 0.0.40
codegen_flags: <defaults>
</compile_context>

<pallas_src>
import math

import jax
import jax.numpy as jnp
from jax import lax
from jax.experimental import pallas as pl
from jax.experimental.pallas import tpu as pltpu


def _round_up(x: int, m: int) -> int:
    return (x + m - 1) // m * m


def _cdiv(a: int, b: int) -> int:
    return -(-a // b)


def _chip_params():
    """Generation-aware knobs: (preferred MXU C_out tile, usable VMEM budget in bytes)."""
    kind = ""
    try:
        kind = jax.devices()[0].device_kind.lower()
    except Exception:
        pass
    is_v5e = ("v5 lite" in kind) or ("v5e" in kind) or ("v5lite" in kind)
    is_v6 = "v6" in kind
    is_v7 = ("v7" in kind) or ("7x" in kind)

    vmem_cap = None
    try:
        info = pltpu.get_tpu_info()
        cap = getattr(info, "vmem_capacity_bytes", None)
        if cap:
            vmem_cap = int(cap)
    except Exception:
        vmem_cap = None
    if vmem_cap is None:
        if is_v7:
            vmem_cap = 64 << 20
        elif is_v5e or is_v6:
            vmem_cap = 128 << 20
        else:
            vmem_cap = 64 << 20          # unknown chip -> conservative (v7x-safe)

    # 256-wide MXU on v6e/v7x, 4x128^2 on v5e.
    mxu_cols = 256 if (is_v6 or is_v7) else 128
    # Leave ~25% headroom for compiler/internal scratch:
    #   v7x: ~48 MiB of 64 MiB physical; v5e/v6e: ~96 MiB of 128 MiB.
    vmem_budget = int(vmem_cap * 3 // 4)
    return mxu_cols, vmem_budget


def _vmem_need(BN, Lt, pad, C_in_p, K, TCO, in_isize, out_isize):
    """Conservative per-step VMEM estimate (double-buffered blocks + scratch + acc)."""
    Lw_vregs = _round_up(Lt + 2 * pad, 128)
    KC = K * C_in_p
    need = 2 * BN * C_in_p * Lw_vregs * in_isize        # double-buffered input block
    need += 2 * TCO * _round_up(KC, 128) * in_isize     # double-buffered weight block
    need += 2 * TCO * 128 * 4                           # bias block (lane-padded)
    need += 2 * BN * TCO * Lt * out_isize               # double-buffered output block
    need += KC * BN * Lt * in_isize                     # im2col slab scratch
    need += TCO * BN * Lt * 4                           # f32 matmul accumulator value
    return need


def _choose_tiles(N, L, pad, C_in_p, K, TCO, in_isize, out_isize,
                  vmem_budget, batch_block, lt_max):
    """Pick (BN, Lt) — biggest batch block, then the biggest balanced L tile that fits VMEM."""
    Lneed = max(L, 1)
    bn_hi = max(1, min(batch_block, N))
    lt_cap0 = max(128, min(_round_up(lt_max, 128), _round_up(Lneed, 128)))
    for BN in range(bn_hi, 0, -1):
        lt_cap = lt_cap0
        while lt_cap >= 128:
            nL = _cdiv(Lneed, lt_cap)
            Lt = _round_up(_cdiv(Lneed, nL), 128)       # balanced, lane-aligned tile
            need = _vmem_need(BN, Lt, pad, C_in_p, K, TCO, in_isize, out_isize)
            if need <= vmem_budget:
                return BN, Lt, need
            lt_cap -= 128
    # Last resort: smallest legal tile (may exceed the soft budget on pathological shapes).
    return 1, 128, _vmem_need(1, 128, pad, C_in_p, K, TCO, in_isize, out_isize)


def conv_bn_relu_kernel(x_ref, w_ref, b_ref, o_ref, slab_ref):
    """Fused Conv1d + folded-BatchNorm + ReLU for one (batch-block, L-tile, C_out-tile).

    x_ref   : (BN, C_in_p, Lw)     compute dtype  input tile incl. conv halo (Lw = Lt + K - 1)
    w_ref   : (TCO, K*C_in_p)      compute dtype  BN-folded im2col weight
    b_ref   : (TCO, 1)             float32        folded bias = (bias - mean)*scale + beta
    o_ref   : (BN, TCO, Lt)        out dtype      lane-dense output tile (Lt % 128 == 0)
    slab_ref: (K*C_in_p, BN*Lt)    compute dtype  reused im2col VMEM scratch
    """
    BN, TCO, Lt = o_ref.shape
    C_in_p = x_ref.shape[1]
    K = w_ref.shape[1] // C_in_p

    # Build the im2col slab ONCE per grid step: rows = (tap, channel), cols = (sample, pos).
    # Destination offsets are sublane/lane aligned (C_in_p % {8,16} == 0, Lt % 128 == 0);
    # the sources xs[:, k:k+Lt] are the unavoidable lane-shifted views (XLU slot, not MXU).
    # BN and K are small compile-time constants -> static unrolled loops.
    # TODO(synk): switch to lax.fori_loop(unroll=True) if batch_block is raised far above 8.
    for n in range(BN):
        xs = x_ref[n]                                   # (C_in_p, Lw)
        for k in range(K):
            slab_ref[k * C_in_p:(k + 1) * C_in_p, n * Lt:(n + 1) * Lt] = xs[:, k:k + Lt]

    # ONE MXU pass per grid step: contraction depth K*C_in_p, BN*Lt output columns.
    acc = jnp.dot(w_ref[...], slab_ref[...], preferred_element_type=jnp.float32)
    acc = jnp.maximum(acc + b_ref[...], 0.0)            # conv bias + BN shift (folded); ReLU
    # Dropout is the identity in eval mode.
    for n in range(BN):
        o_ref[n] = acc[:, n * Lt:(n + 1) * Lt].astype(o_ref.dtype)   # lane-aligned slices


def conv1d_norm_forward(x, weight, bias, bn_gamma, bn_beta, bn_mean, bn_var,
                        eps=1e-5, compute_dtype=jnp.bfloat16, out_dtype=None,
                        batch_block=8, lt_max=2048, trim=True):
    """Pallas-backed Conv1DNorm eval forward. x: (N, C_in, L)."""
    N, C_in, L = x.shape
    C_out, _, K = weight.shape
    assert K % 2 == 1, "Conv1DNorm default padding requires an odd kernel_size"
    pad = (K - 1) // 2
    out_dtype = x.dtype if out_dtype is None else out_dtype

    # ---- fold BatchNorm (eval) into the conv weight and a single shift (host side, tiny) ----
    scale = bn_gamma.astype(jnp.float32) / jnp.sqrt(bn_var.astype(jnp.float32) + eps)
    w_eff = weight.astype(jnp.float32) * scale[:, None, None]                 # (C_out, C_in, K)
    b_eff = (bias.astype(jnp.float32) - bn_mean.astype(jnp.float32)) * scale \
            + bn_beta.astype(jnp.float32)                                     # (C_out,)

    # ---- generation-aware tiling ----
    in_isize = jnp.dtype(compute_dtype).itemsize
    out_isize = jnp.dtype(out_dtype).itemsize
    sub = 8 * (4 // in_isize)                 # sublane tile: 8 (f32) / 16 (bf16)
    mxu_cols, vmem_budget = _chip_params()

    C_in_p = _round_up(C_in, sub)
    max_cout_block = 256 if (mxu_cols >= 256 and C_out >= 256) else 128
    if C_out <= max_cout_block:
        C_out_p = _round_up(C_out, sub)
        TCO = C_out_p
    else:
        C_out_p = _round_up(C_out, max_cout_block)
        TCO = max_cout_block

    BN, Lt, vmem_need = _choose_tiles(N, L, pad, C_in_p, K, TCO, in_isize, out_isize,
                                      vmem_budget, batch_block, lt_max)
    Np = _round_up(max(N, 1), BN)
    nL = _cdiv(max(L, 1), Lt)
    Ltot = nL * Lt
    Lw = Lt + 2 * pad

    # ---- host-side input prep: one fused cast+pad (+ halo'd L-tile gather when nL > 1) ----
    xp = jnp.pad(x.astype(compute_dtype),
                 ((0, Np - N), (0, C_in_p - C_in), (pad, pad + Ltot - L)))    # (Np, C_in_p, Ltot+2p)
    if nL == 1:
        xt = xp[:, None]                                                      # (Np, 1, C_in_p, Lw)
    else:
        cols = jnp.arange(nL)[:, None] * Lt + jnp.arange(Lw)[None, :]         # (nL, Lw)
        xt = jnp.transpose(xp[:, :, cols], (0, 2, 1, 3))                      # (Np, nL, C_in_p, Lw)

    # im2col weight: rows (co), cols ordered (k, c) to match the in-kernel slab.
    w_pad = jnp.pad(w_eff, ((0, C_out_p - C_out), (0, C_in_p - C_in), (0, 0)))
    w2d = jnp.transpose(w_pad, (0, 2, 1)).reshape(C_out_p, K * C_in_p).astype(compute_dtype)
    b2d = jnp.pad(b_eff, ((0, C_out_p - C_out),)).reshape(C_out_p, 1)         # f32

    grid = (Np // BN, nL, C_out_p // TCO)

    cost = pl.CostEstimate(
        flops=2 * Np * C_out_p * (K * C_in_p) * Ltot,
        transcendentals=0,
        # Input is read once from HBM (its block index is independent of the innermost C_out
        # axis); weight/bias are re-fetched per (batch, L) step; output written once.
        bytes_accessed=(xt.size * in_isize
                        + w2d.size * in_isize * grid[0] * grid[1]
                        + b2d.size * 4 * grid[0] * grid[1]
                        + Np * C_out_p * Ltot * out_isize),
    )

    vmem_limit = int(min(max(vmem_need + (8 << 20), 32 << 20), vmem_budget))
    vmem_limit = max(vmem_limit, vmem_need + (2 << 20))     # fallback path safety

    out = pl.pallas_call(
        conv_bn_relu_kernel,
        out_shape=jax.ShapeDtypeStruct((Np, C_out_p, Ltot), out_dtype),
        grid_spec=pltpu.PrefetchScalarGridSpec(
            num_scalar_prefetch=0,
            grid=grid,
            in_specs=[
                # halo'd input tile; the L-tile axis is squeezed out of the kernel ref
                pl.BlockSpec((BN, None, C_in_p, Lw), lambda n, l, c: (n, l, 0, 0)),
                pl.BlockSpec((TCO, K * C_in_p), lambda n, l, c: (c, 0)),
                pl.BlockSpec((TCO, 1), lambda n, l, c: (c, 0)),
            ],
            out_specs=pl.BlockSpec((BN, TCO, Lt), lambda n, l, c: (n, c, l)),
            scratch_shapes=[pltpu.VMEM((K * C_in_p, BN * Lt), compute_dtype)],
        ),
        compiler_params=pltpu.CompilerParams(
            # batch & L axes have disjoint input -> megacore split lands there (v7x);
            # C_out axis is innermost & "arbitrary" so the input block stays resident.
            dimension_semantics=("parallel", "parallel", "arbitrary"),
            vmem_limit_bytes=vmem_limit,
        ),
        cost_estimate=cost,
    )(xt, w2d, b2d)

    if trim:
        out = out[:N, :C_out, :L]
    return out


def reference_forward(x, weight, bias, bn_gamma, bn_beta, bn_mean, bn_var, eps=1e-5):
    """Plain-JAX reference (mirrors PyTorch eval-mode forward), all f32."""
    K = weight.shape[2]
    pad = (K - 1) // 2
    conv = lax.conv_general_dilated(
        x, weight, window_strides=(1,), padding=[(pad, pad)],
        dimension_numbers=("NCH", "OIH", "NCH"),
        preferred_element_type=jnp.float32,
    ) + bias[None, :, None]
    normed = (conv - bn_mean[None, :, None]) / jnp.sqrt(bn_var[None, :, None] + eps)
    normed = normed * bn_gamma[None, :, None] + bn_beta[None, :, None]
    return jnp.maximum(normed, 0.0)


if __name__ == "__main__":
    # Small shapes consistent with Conv1d: (batch, in_channels, length)
    N, C_in, C_out, L, K = 2, 4, 8, 16, 3

    key = jax.random.PRNGKey(0)
    kx, kw, kb = jax.random.split(key, 3)

    x = jax.random.normal(kx, (N, C_in, L), dtype=jnp.float32)

    # Xavier-uniform weight init, gain('linear') = 1.0 (matches torch.nn.init.xavier_uniform_)
    fan_in = C_in * K
    fan_out = C_out * K
    a = math.sqrt(6.0 / (fan_in + fan_out))
    weight = jax.random.uniform(kw, (C_out, C_in, K), dtype=jnp.float32, minval=-a, maxval=a)

    # PyTorch Conv1d bias init: U(-1/sqrt(fan_in), 1/sqrt(fan_in))
    bb = 1.0 / math.sqrt(fan_in)
    bias = jax.random.uniform(kb, (C_out,), dtype=jnp.float32, minval=-bb, maxval=bb)

    # BatchNorm1d default parameters / running stats (eval mode).
    bn_gamma = jnp.ones((C_out,), jnp.float32)
    bn_beta = jnp.zeros((C_out,), jnp.float32)
    bn_mean = jnp.zeros((C_out,), jnp.float32)
    bn_var = jnp.ones((C_out,), jnp.float32)

    ref = reference_forward(x, weight, bias, bn_gamma, bn_beta, bn_mean, bn_var)

    # Exact-precision path: f32 compute, f32 output; tight check against the f32 reference.
    out_f32 = conv1d_norm_forward(x, weight, bias, bn_gamma, bn_beta, bn_mean, bn_var,
                                  compute_dtype=jnp.float32)
    out_f32 = jax.block_until_ready(out_f32)
    assert out_f32.shape == (N, C_out, L)
    assert jnp.allclose(out_f32, ref, atol=1e-5, rtol=1e-5), "f32 Pallas kernel mismatch"

    # Fast path (default): bf16 compute + bf16 stores -> ~half the HBM traffic, 2x MXU rate.
    out_bf16 = conv1d_norm_forward(x, weight, bias, bn_gamma, bn_beta, bn_mean, bn_var,
                                   compute_dtype=jnp.bfloat16, out_dtype=jnp.bfloat16)
    out_bf16 = jax.block_until_ready(out_bf16)
    assert out_bf16.shape == (N, C_out, L)
    assert jnp.allclose(out_bf16.astype(jnp.float32), ref, atol=5e-2, rtol=5e-2), \
        "bf16 Pallas kernel mismatch"

    print("KERNEL_OK")
</pallas_src>

<mosaic_0001>
module attributes {stable_mosaic.version = 11 : i64} {
  func.func @conv_bn_relu_kernel(%arg0: i32, %arg1: i32, %arg2: i32, %arg3: memref<2x1x8x130xf32, #tpu.memory_space<vmem>>, %arg4: memref<8x24xf32, #tpu.memory_space<vmem>>, %arg5: memref<8x1xf32, #tpu.memory_space<vmem>>, %arg6: memref<2x8x128xf32, #tpu.memory_space<vmem>>, %arg7: memref<24x256xf32, #tpu.memory_space<vmem>>) attributes {dimension_semantics = [#tpu.dimension_semantics<parallel>, #tpu.dimension_semantics<parallel>, #tpu.dimension_semantics<arbitrary>], iteration_bounds = array<i64: 1, 1, 1>, scalar_prefetch = 0 : i64, scratch_operands = 1 : i64, tpu.core_type = #tpu.core_type<tc>, window_params = [{transform_indices = @transform_0, window_bounds = array<i64: 2, 1, 8, 130>}, {transform_indices = @transform_1, window_bounds = array<i64: 8, 24>}, {transform_indices = @transform_2, window_bounds = array<i64: 8, 1>}, {transform_indices = @transform_3, window_bounds = array<i64: 2, 8, 128>}]} {
    %c0 = arith.constant 0 : index
    %c0_0 = arith.constant 0 : index
    %c0_1 = arith.constant 0 : index
    %c0_2 = arith.constant 0 : index
    %0 = vector.load %arg3[%c0, %c0_0, %c0_1, %c0_2] : memref<2x1x8x130xf32, #tpu.memory_space<vmem>>, vector<1x1x8x130xf32>
    %1 = vector.shape_cast %0 : vector<1x1x8x130xf32> to vector<8x130xf32>
    %2 = vector.extract_strided_slice %1 {offsets = [0, 0], sizes = [8, 128], strides = [1, 1]} : vector<8x130xf32> to vector<8x128xf32>
    %c0_3 = arith.constant 0 : index
    %c0_4 = arith.constant 0 : index
    %3 = vector.load %arg7[%c0_3, %c0_4] : memref<24x256xf32, #tpu.memory_space<vmem>>, vector<8x128xf32>
    tpu.vector_store %arg7[%c0_3, %c0_4], %2 {strides = array<i32>} : memref<24x256xf32, #tpu.memory_space<vmem>>, vector<8x128xf32>,
    %4 = vector.extract_strided_slice %1 {offsets = [0, 1], sizes = [8, 128], strides = [1, 1]} : vector<8x130xf32> to vector<8x128xf32>
    %c8 = arith.constant 8 : index
    %c0_5 = arith.constant 0 : index
    %5 = vector.load %arg7[%c8, %c0_5] : memref<24x256xf32, #tpu.memory_space<vmem>>, vector<8x128xf32>
    tpu.vector_store %arg7[%c8, %c0_5], %4 {strides = array<i32>} : memref<24x256xf32, #tpu.memory_space<vmem>>, vector<8x128xf32>,
    %6 = vector.extract_strided_slice %1 {offsets = [0, 2], sizes = [8, 128], strides = [1, 1]} : vector<8x130xf32> to vector<8x128xf32>
    %c16 = arith.constant 16 : index
    %c0_6 = arith.constant 0 : index
    %7 = vector.load %arg7[%c16, %c0_6] : memref<24x256xf32, #tpu.memory_space<vmem>>, vector<8x128xf32>
    tpu.vector_store %arg7[%c16, %c0_6], %6 {strides = array<i32>} : memref<24x256xf32, #tpu.memory_space<vmem>>, vector<8x128xf32>,
    %c1 = arith.constant 1 : index
    %c0_7 = arith.constant 0 : index
    %c0_8 = arith.constant 0 : index
    %c0_9 = arith.constant 0 : index
    %8 = vector.load %arg3[%c1, %c0_7, %c0_8, %c0_9] : memref<2x1x8x130xf32, #tpu.memory_space<vmem>>, vector<1x1x8x130xf32>
    %9 = vector.shape_cast %8 : vector<1x1x8x130xf32> to vector<8x130xf32>
    %10 = vector.extract_strided_slice %9 {offsets = [0, 0], sizes = [8, 128], strides = [1, 1]} : vector<8x130xf32> to vector<8x128xf32>
    %c0_10 = arith.constant 0 : index
    %c128 = arith.constant 128 : index
    %11 = vector.load %arg7[%c0_10, %c128] : memref<24x256xf32, #tpu.memory_space<vmem>>, vector<8x128xf32>
    tpu.vector_store %arg7[%c0_10, %c128], %10 {strides = array<i32>} : memref<24x256xf32, #tpu.memory_space<vmem>>, vector<8x128xf32>,
    %12 = vector.extract_strided_slice %9 {offsets = [0, 1], sizes = [8, 128], strides = [1, 1]} : vector<8x130xf32> to vector<8x128xf32>
    %c8_11 = arith.constant 8 : index
    %c128_12 = arith.constant 128 : index
    %13 = vector.load %arg7[%c8_11, %c128_12] : memref<24x256xf32, #tpu.memory_space<vmem>>, vector<8x128xf32>
    tpu.vector_store %arg7[%c8_11, %c128_12], %12 {strides = array<i32>} : memref<24x256xf32, #tpu.memory_space<vmem>>, vector<8x128xf32>,
    %14 = vector.extract_strided_slice %9 {offsets = [0, 2], sizes = [8, 128], strides = [1, 1]} : vector<8x130xf32> to vector<8x128xf32>
    %c16_13 = arith.constant 16 : index
    %c128_14 = arith.constant 128 : index
    %15 = vector.load %arg7[%c16_13, %c128_14] : memref<24x256xf32, #tpu.memory_space<vmem>>, vector<8x128xf32>
    tpu.vector_store %arg7[%c16_13, %c128_14], %14 {strides = array<i32>} : memref<24x256xf32, #tpu.memory_space<vmem>>, vector<8x128xf32>,
    %c0_15 = arith.constant 0 : index
    %c0_16 = arith.constant 0 : index
    %16 = vector.load %arg4[%c0_15, %c0_16] : memref<8x24xf32, #tpu.memory_space<vmem>>, vector<8x24xf32>
    %c0_17 = arith.constant 0 : index
    %c0_18 = arith.constant 0 : index
    %17 = vector.load %arg7[%c0_17, %c0_18] : memref<24x256xf32, #tpu.memory_space<vmem>>, vector<24x256xf32>
    %cst = arith.constant dense<0.000000e+00> : vector<8x256xf32>
    %18 = tpu.matmul %16, %17, %cst {dimension_numbers = #tpu.dot_dimension_numbers<[1], [0], [0], [1], [0, 0, 1, 1], [], []>} : vector<8x24xf32>, vector<24x256xf32>, vector<8x256xf32> -> vector<8x256xf32>
    %c0_19 = arith.constant 0 : index
    %c0_20 = arith.constant 0 : index
    %19 = vector.load %arg5[%c0_19, %c0_20] : memref<8x1xf32, #tpu.memory_space<vmem>>, vector<8x1xf32>
    %20 = vector.broadcast %19 : vector<8x1xf32> to vector<8x256xf32>
    %21 = arith.addf %18, %20 : vector<8x256xf32>
    %cst_21 = arith.constant 0.000000e+00 : f32
    %22 = vector.broadcast %cst_21 : f32 to vector<8x256xf32>
    %23 = arith.maximumf %21, %22 : vector<8x256xf32>
    %24 = vector.extract_strided_slice %23 {offsets = [0, 0], sizes = [8, 128], strides = [1, 1]} : vector<8x256xf32> to vector<8x128xf32>
    %c0_22 = arith.constant 0 : index
    %c0_23 = arith.constant 0 : index
    %c0_24 = arith.constant 0 : index
    %25 = vector.load %arg6[%c0_22, %c0_23, %c0_24] : memref<2x8x128xf32, #tpu.memory_space<vmem>>, vector<1x8x128xf32>
    %26 = vector.shape_cast %25 : vector<1x8x128xf32> to vector<8x128xf32>
    %27 = vector.shape_cast %24 : vector<8x128xf32> to vector<1x8x128xf32>
    tpu.vector_store %arg6[%c0_22, %c0_23, %c0_24], %27 {strides = array<i32>} : memref<2x8x128xf32, #tpu.memory_space<vmem>>, vector<1x8x128xf32>,
    %28 = vector.extract_strided_slice %23 {offsets = [0, 128], sizes = [8, 128], strides = [1, 1]} : vector<8x256xf32> to vector<8x128xf32>
    %c1_25 = arith.constant 1 : index
    %c0_26 = arith.constant 0 : index
    %c0_27 = arith.constant 0 : index
    %29 = vector.load %arg6[%c1_25, %c0_26, %c0_27] : memref<2x8x128xf32, #tpu.memory_space<vmem>>, vector<1x8x128xf32>
    %30 = vector.shape_cast %29 : vector<1x8x128xf32> to vector<8x128xf32>
    %31 = vector.shape_cast %28 : vector<8x128xf32> to vector<1x8x128xf32>
    tpu.vector_store %arg6[%c1_25, %c0_26, %c0_27], %31 {strides = array<i32>} : memref<2x8x128xf32, #tpu.memory_space<vmem>>, vector<1x8x128xf32>,
    return
  }
  func.func @transform_0(%arg0: i32, %arg1: i32, %arg2: i32) -> (i32, i32, i32, i32) {
    %c0_i32 = arith.constant 0 : i32
    %c0_i32_0 = arith.constant 0 : i32
    %c0_i32_1 = arith.constant 0 : i32
    return %arg0, %arg1, %c0_i32, %c0_i32_0 : i32, i32, i32, i32
  }
  func.func @transform_1(%arg0: i32, %arg1: i32, %arg2: i32) -> (i32, i32) {
    %c0_i32 = arith.constant 0 : i32
    %c0_i32_0 = arith.constant 0 : i32
    return %arg2, %c0_i32 : i32, i32
  }
  func.func @transform_2(%arg0: i32, %arg1: i32, %arg2: i32) -> (i32, i32) {
    %c0_i32 = arith.constant 0 : i32
    %c0_i32_0 = arith.constant 0 : i32
    return %arg2, %c0_i32 : i32, i32
  }
  func.func @transform_3(%arg0: i32, %arg1: i32, %arg2: i32) -> (i32, i32, i32) {
    %c0_i32 = arith.constant 0 : i32
    return %arg0, %arg2, %arg1 : i32, i32, i32
  }
}

</mosaic_0001>

<llo_original>
// kernel: tpu_custom_call.1
$region0: #{tpu_custom_call.1}
  #allocation0 [shape = 'u32[]', space=smem, size = 0x4, offset = 0x4, fixed_abs, tag = 'smem constant byte address 0x4 - core index']
  #allocation1 [shape = 'u32[144,128]{1,0:T(1,128)}', space=vmem, size = 0x12000, scoped, tag = 'internal scratch']
  #allocation2 [shape = 'f32[24,256]{1,0:T(8,128)}', space=vmem, size = 0x6000, scoped, tag = 'scratch operand']
  %s0 = inlined_call_operand.hbm [shape: f32[2,1,8,130], index: 0, kind: input, shape index: {}]
  %s1 = inlined_call_operand.vmem [shape: f32[8,24], index: 1, kind: input, shape index: {}]
  %s2 = inlined_call_operand.vmem [shape: f32[8,1], index: 2, kind: input, shape index: {}]
  %s3 = inlined_call_operand.hbm [shape: f32[2,8,128], index: 3, kind: output, shape index: {}]
  %s4 = sld [smem:[#allocation0]]
  $region26: #{tpu_custom_call.1} parent=0
    _
  %s6 = ssub.s32 1, %s4
  %s7 = scalar_select 0, %s6, %s4
  $region1: #{tpu_custom_call.1} parent=0
    #allocation3 [shape = 'u8[16384]{0}', space=vmem, size = 0x4000, scoped, tag = 'input window, operand 0, single buffered']
    #allocation4 [shape = 's32[1]{0}', space=sflag, size = 0x4, scoped, tag = 'scoped memory for tpu_custom_call.1']
    #allocation5 [shape = 's32[1]{0}', space=sflag, size = 0x4, scoped, tag = 'scoped memory for tpu_custom_call.1']
    #allocation6 [shape = 'u8[8192]{0}', space=vmem, size = 0x2000, scoped, tag = 'output window, operand 0, single buffered']
    %8 = vsyncpa [#allocation4], 0
    %9 = vsyncpa [#allocation5], 0
    // Predicated region
    $region2: #{tpu_custom_call.1} parent=1 // pred_check
      _
    $region3: #{tpu_custom_call.1} parent=1 // pred_check_branch
      %11 = sbr.rel (0) target = $region5
    $region4: #{tpu_custom_call.1} parent=1 // pred_region
      %s13 = ssub.s32 512, 512
      %14 = vsyncadd [#allocation4], %s13
      %s15 = sshll.u32 [#allocation3], 4
      %s16 = int_to_ptr.vmem [resolvable:$true] %s15
      %21 = dma.hbm_to_vmem [thread:$0]  %s0, 512, %s16, [#allocation4], 256, 256, 16
    $region5: #{tpu_custom_call.1} parent=1 // pred_fallthru
      _
    // Predicated region
    $region6: #{tpu_custom_call.1} parent=1 // pred_check
      _
    $region7: #{tpu_custom_call.1} parent=1 // pred_check_branch
      %23 = sbr.rel (0) target = $region9
    $region8: #{tpu_custom_call.1} parent=1 // pred_region
      _
    $region9: #{tpu_custom_call.1} parent=1 // pred_fallthru
      _
    // Predicated region
    $region10: #{tpu_custom_call.1} parent=1 // pred_check
      _
    $region11: #{tpu_custom_call.1} parent=1 // pred_check_branch
      %25 = sbr.rel (0) target = $region13
    $region12: #{tpu_custom_call.1} parent=1 // pred_region
      _
    $region13: #{tpu_custom_call.1} parent=1 // pred_fallthru
      _
    // Predicated region
    $region14: #{tpu_custom_call.1} parent=1 // pred_check
      _
    $region15: #{tpu_custom_call.1} parent=1 // pred_check_branch
      %27 = sbr.rel (0) target = $region17
    $region16: #{tpu_custom_call.1} parent=1 // pred_region
      %28 = dma.done [#allocation4], 512
    $region17: #{tpu_custom_call.1} parent=1 // pred_fallthru
      _
    %v29 = vld [vmem:[#allocation3] sm:$0xff]
    %v30 = vld [vmem:[#allocation3 + $0x8] sm:$0xff]
    %31 = vst [vmem:[#allocation2] sm:$0xff] %v29
    %34 = vrot.lane.b32.xlu0 %v29, 127
    %v35 = vpop.permute.xlu0 %34
    %36 = vrot.lane.b32.xlu0 %v30, 127
    %v37 = vpop.permute.xlu0 %36
    %vm38 = vcmask 1039360
    %v39 = vsel %vm38, %v35, %v37
    %41 = vst [vmem:[#allocation2 + $0x10] sm:$0xff] %v39
    %42 = vrot.lane.b32.xlu0 %v29, 126
    %v43 = vpop.permute.xlu0 %42
    %44 = vrot.lane.b32.xlu0 %v30, 126
    %v45 = vpop.permute.xlu0 %44
    %vm46 = vcmask 1031168
    %v47 = vsel %vm46, %v43, %v45
    %49 = vst [vmem:[#allocation2 + $0x20] sm:$0xff] %v47
    %s50 = scalar_lea.vmem [#allocation3], 16
    %v51 = vld [vmem:[%s50] sm:$0xff]
    %v52 = vld [vmem:[%s50 + $0x8] sm:$0xff]
    %53 = vst [vmem:[#allocation2 + $0x8] sm:$0xff] %v51
    %56 = vrot.lane.b32.xlu0 %v51, 127
    %v57 = vpop.permute.xlu0 %56
    %58 = vrot.lane.b32.xlu0 %v52, 127
    %v59 = vpop.permute.xlu0 %58
    %v60 = vsel %vm38, %v57, %v59
    %62 = vst [vmem:[#allocation2 + $0x18] sm:$0xff] %v60
    %63 = vrot.lane.b32.xlu0 %v51, 126
    %v64 = vpop.permute.xlu0 %63
    %65 = vrot.lane.b32.xlu0 %v52, 126
    %v66 = vpop.permute.xlu0 %65
    %v67 = vsel %vm46, %v64, %v66
    %69 = vst [vmem:[#allocation2 + $0x28] sm:$0xff] %v67
    %v70 = vld [vmem:[%s1] sm:$0xff]
    %v71 = vld [vmem:[#allocation2] sm:$0xff]
    %v72 = vld [vmem:[#allocation2 + $0x8] sm:$0xff]
    %v73 = vld [vmem:[#allocation2 + $0x10] sm:$0xff]
    %v74 = vld [vmem:[#allocation2 + $0x18] sm:$0xff]
    %v75 = vld [vmem:[#allocation2 + $0x20] sm:$0xff]
    %v76 = vld [vmem:[#allocation2 + $0x28] sm:$0xff]
    %v77 = vld [vmem:[%s2] sm:$0xff]
    %79 = vset.pattern.permute.xlu0 0
    %80 = vperm.xlu0 %79, %v77
    %v81 = vpop.permute.xlu0 %80
    %vm83 = vcmask 195584
    %v85 = vsel %vm83, %v70, 0
    %87 = vmatprep.subr.mxu0 %v72
    %88 = vmatpush1.msra.mxu0 %v71
    %89 = vmatprep.subr.mxu0 %v74
    %90 = vmatpush1.msra.mxu0 %v73
    %91 = vmatprep.subr.mxu0 %v76
    %92 = vmatpush1.msra.mxu0 %v75
    %93 = vmatprep.subr.mxu0 0.0
    %94 = vmatpush1.msra.mxu0 0.0
    %95 = vmatprep.subr.mxu0 0.0
    %96 = vmatpush1.msra.mxu0 0.0
    %97 = vmatprep.subr.mxu0 0.0
    %98 = vmatpush1.msra.mxu0 0.0
    %99 = vmatprep.subr.mxu0 0.0
    %100 = vmatpush1.msra.mxu0 0.0
    %101 = vmatprep.subr.mxu0 0.0
    %102 = vmatpush1.msra.mxu0 0.0
    %103 = vmatprep.subr.mxu0 0.0
    %104 = vmatpush1.msra.mxu0 0.0
    %105 = vmatprep.subr.mxu0 0.0
    %106 = vmatpush1.msra.mxu0 0.0
    %107 = vmatprep.subr.mxu0 0.0
    %108 = vmatpush1.msra.mxu0 0.0
    %109 = vmatprep.subr.mxu0 0.0
    %110 = vmatpush1.msra.mxu0 0.0
    %111 = vmatprep.subr.mxu0 0.0
    %112 = vmatpush1.msra.mxu0 0.0
    %113 = vmatprep.subr.mxu0 0.0
    %114 = vmatpush1.msra.mxu0 0.0
    %115 = vmatprep.subr.mxu0 0.0
    %116 = vmatpush1.msra.mxu0 0.0
    %117 = vmatprep.subr.mxu0 0.0
    %118 = vmatpush1.msra.mxu0 0.0
    %119 = vmatprep.subr.mxu0 0.0
    %120 = vmatpush1.msra.mxu0 0.0
    %121 = vmatprep.subr.mxu0 0.0
    %122 = vmatpush1.msra.mxu0 0.0
    %123 = vmatprep.subr.mxu0 0.0
    %124 = vmatpush1.msra.mxu0 0.0
    %125 = vmatprep.subr.mxu0 0.0
    %126 = vmatpush1.msra.mxu0 0.0
    %127 = vmatprep.subr.mxu0 0.0
    %128 = vmatpush1.msra.mxu0 0.0
    %129 = vmatprep.subr.mxu0 0.0
    %130 = vmatpush1.msra.mxu0 0.0
    %131 = vmatprep.subr.mxu0 0.0
    %132 = vmatpush1.msra.mxu0 0.0
    %133 = vmatprep.subr.mxu0 0.0
    %134 = vmatpush1.msra.mxu0 0.0
    %135 = vmatprep.subr.mxu0 0.0
    %136 = vmatpush1.msra.mxu0 0.0
    %137 = vmatprep.subr.mxu0 0.0
    %138 = vmatpush1.msra.mxu0 0.0
    %139 = vmatprep.subr.mxu0 0.0
    %140 = vmatpush1.msra.mxu0 0.0
    %141 = vmatprep.subr.mxu0 0.0
    %142 = vmatpush1.msra.mxu0 0.0
    %143 = vmatprep.subr.mxu0 0.0
    %144 = vmatpush1.msra.mxu0 0.0
    %145 = vmatprep.subr.mxu0 0.0
    %146 = vmatpush1.msra.mxu0 0.0
    %147 = vmatprep.subr.mxu0 0.0
    %148 = vmatpush1.msra.mxu0 0.0
    %149 = vmatprep.subr.mxu0 0.0
    %150 = vmatpush1.msra.mxu0 0.0
    %151 = vmatprep.mubr.f32.mxu0 0.0
    %152 = vmatmul.mubr.f32.gmra.mrb[0].mxu0 %v85
    %v153 = vpop.f32.mrb[0].mxu0
    %v154 = vadd.f32 %v81, %v153
    %v155 = vpop.f32.mrb[0].mxu0
    %v156 = vadd.f32 %v81, %v155
    %157 = vdwg.mxu0
    %v158 = vmax.f32 %v154, 0.0
    %v159 = vmax.f32 %v156, 0.0
    %160 = vst [vmem:[#allocation6] sm:$0xff] %v158
    %s161 = scalar_lea.vmem [#allocation6], 8
    %162 = vst [vmem:[%s161] sm:$0xff] %v159
    // Predicated region
    $region18: #{tpu_custom_call.1} parent=1 // pred_check
      _
    $region19: #{tpu_custom_call.1} parent=1 // pred_check_branch
      %164 = sbr.rel (0) target = $region21
    $region20: #{tpu_custom_call.1} parent=1 // pred_region
      %s166 = ssub.s32 256, 256
      %167 = vsyncadd [#allocation5], %s166
      %s168 = sshll.u32 [#allocation6], 4
      %s169 = int_to_ptr.vmem [resolvable:$true] %s168
      %174 = dma.vmem_to_hbm [thread:$0]  %s169, 256, %s3, [#allocation5], 128, 128, 8
    $region21: #{tpu_custom_call.1} parent=1 // pred_fallthru
      _
    // Predicated region
    $region22: #{tpu_custom_call.1} parent=1 // pred_check
      _
    $region23: #{tpu_custom_call.1} parent=1 // pred_check_branch
      %176 = sbr.rel (0) target = $region25
    $region24: #{tpu_custom_call.1} parent=1 // pred_region
      %177 = dma.done [#allocation5], 256
    $region25: #{tpu_custom_call.1} parent=1 // pred_fallthru
      _
    %178 = vsyncpa [#allocation4], 1
    %179 = vsyncpa [#allocation5], 1

</llo_original>
